<compile_context>
chip_gen: v7x
topology: tpu7x:2x2x1
jax: 0.10.0
libtpu: 0.0.40
codegen_flags: <defaults>
</compile_context>

<pallas_src>
import functools
import math

import jax
import jax.numpy as jnp
from jax.experimental import pallas as pl
from jax.experimental.pallas import tpu as pltpu


def _gelu(x, approximate):
    if approximate:
        # tanh-approximate GELU: transcendental goes to the EUP slot instead of
        # a long erf polynomial on the (bottleneck) VALU slot.
        return jax.nn.gelu(x, approximate=True)
    # Exact erf formulation (PyTorch nn.GELU() default).
    return 0.5 * x * (1.0 + jax.lax.erf(x * (1.0 / math.sqrt(2.0))))


def _actor_kernel(obs_ref, w1_ref, b1_ref, w2_ref, b2_ref, w3_ref, b3_ref,
                  out_ref, *, action_bound, approximate_gelu):
    # MXU operand dtype follows the weight dtype (bf16 by default); all
    # accumulation, bias adds and activations stay in f32 on the VPU/EUP.
    mxu_dtype = w1_ref.dtype
    x = obs_ref[...].astype(mxu_dtype)  # no-op when weights are f32

    # Layer 1: Linear + GELU
    h = jnp.dot(x, w1_ref[...], preferred_element_type=jnp.float32) + b1_ref[...]
    h = _gelu(h, approximate_gelu)

    # Layer 2: Linear + GELU
    h = jnp.dot(h.astype(mxu_dtype), w2_ref[...],
                preferred_element_type=jnp.float32) + b2_ref[...]
    h = _gelu(h, approximate_gelu)

    # Output layer: Linear + Tanh, scaled by action_bound.
    h = jnp.dot(h.astype(mxu_dtype), w3_ref[...],
                preferred_element_type=jnp.float32) + b3_ref[...]
    out_ref[...] = (action_bound * jnp.tanh(h)).astype(out_ref.dtype)


def _tensorcores_per_chip():
    # v7x has 2 TensorCores per chip; the "parallel" grid axis shards over them.
    try:
        kind = jax.devices()[0].device_kind.lower()
    except Exception:
        return 1
    return 2 if ("v7" in kind or "7x" in kind) else 1


def _default_batch_tile(batch, n_cores):
    # One big tile per TensorCore (fewer serial grid steps / MXU weight
    # re-pushes), capped at 512 rows; always a multiple of 8 sublanes.
    b8 = max(8, ((batch + 7) // 8) * 8)
    per_core = (b8 + n_cores - 1) // n_cores
    per_core = max(8, ((per_core + 7) // 8) * 8)
    return min(per_core, 512)


def actor_forward(obs, params, action_bound, *, batch_tile=None,
                  weight_dtype=jnp.bfloat16, approximate_gelu=True):
    """obs: [B, obs_dim] float32.  params: dict of w1,b1,w2,b2,w3,b3 (f32).

    Note: the default (bf16 MXU operands + tanh-approximate GELU) deviates
    slightly from the f32 PyTorch module; pass weight_dtype=jnp.float32 and
    approximate_gelu=False for the closest-to-reference numerics.
    """
    B, obs_dim = obs.shape
    w1, b1 = params["w1"], params["b1"]
    w2, b2 = params["w2"], params["b2"]
    w3, b3 = params["w3"], params["b3"]
    h1 = w1.shape[1]
    h2 = w2.shape[1]
    act_dim = w3.shape[1]
    assert h1 % 128 == 0 and h2 % 128 == 0, "hidden dims must be lane-aligned"

    # --- batch tiling (rows only; no lane padding anywhere) -----------------
    n_cores = _tensorcores_per_chip()
    tb = batch_tile if batch_tile is not None else _default_batch_tile(B, n_cores)
    assert tb % 8 == 0, "batch tile must be a multiple of 8 sublanes"
    pad_rows = (-B) % tb
    obs_p = jnp.pad(obs, ((0, pad_rows), (0, 0))) if pad_rows else obs
    Bp = B + pad_rows
    grid = (Bp // tb,)

    # --- operand dtypes ------------------------------------------------------
    w1_c = w1.astype(weight_dtype)
    w2_c = w2.astype(weight_dtype)
    w3_c = w3.astype(weight_dtype)
    b1_c = b1.astype(jnp.float32)
    b2_c = b2.astype(jnp.float32)
    b3_c = b3.astype(jnp.float32)

    # --- cost hint for the XLA scheduler ------------------------------------
    flops = 2 * Bp * (obs_dim * h1 + h1 * h2 + h2 * act_dim)
    transcendentals = Bp * (h1 + h2 + act_dim)
    bytes_accessed = int(
        obs_p.size * obs_p.dtype.itemsize
        + sum(a.size * a.dtype.itemsize
              for a in (w1_c, b1_c, w2_c, b2_c, w3_c, b3_c))
        + Bp * act_dim * 4)

    kernel = functools.partial(_actor_kernel,
                               action_bound=float(action_bound),
                               approximate_gelu=approximate_gelu)

    out = pl.pallas_call(
        kernel,
        out_shape=jax.ShapeDtypeStruct((Bp, act_dim), jnp.float32),
        grid_spec=pltpu.PrefetchScalarGridSpec(
            num_scalar_prefetch=0,
            grid=grid,
            in_specs=[
                pl.BlockSpec((tb, obs_dim), lambda i: (i, 0)),   # obs (streamed)
                pl.BlockSpec((obs_dim, h1), lambda i: (0, 0)),   # w1 (resident)
                pl.BlockSpec((1, h1), lambda i: (0, 0)),         # b1
                pl.BlockSpec((h1, h2), lambda i: (0, 0)),        # w2
                pl.BlockSpec((1, h2), lambda i: (0, 0)),         # b2
                pl.BlockSpec((h2, act_dim), lambda i: (0, 0)),   # w3
                pl.BlockSpec((1, act_dim), lambda i: (0, 0)),    # b3
            ],
            out_specs=pl.BlockSpec((tb, act_dim), lambda i: (i, 0)),
        ),
        compiler_params=pltpu.CompilerParams(
            dimension_semantics=("parallel",)),
        cost_estimate=pl.CostEstimate(flops=flops,
                                      transcendentals=transcendentals,
                                      bytes_accessed=bytes_accessed),
    )(obs_p, w1_c, b1_c, w2_c, b2_c, w3_c, b3_c)

    return out if pad_rows == 0 else out[:B]


def init_actor_params(key, obs_dim, hidden_dims, action_dim):
    """Deterministic synthetic init (same shapes as the PyTorch module)."""
    dims = [obs_dim] + list(hidden_dims) + [action_dim]
    params = {}
    keys = jax.random.split(key, 2 * (len(dims) - 1))
    for j in range(len(dims) - 1):
        fan_in, fan_out = dims[j], dims[j + 1]
        bound = 1.0 / math.sqrt(fan_in)
        w = jax.random.uniform(keys[2 * j], (fan_in, fan_out),
                               minval=-bound, maxval=bound, dtype=jnp.float32)
        b = jax.random.uniform(keys[2 * j + 1], (1, fan_out),
                               minval=-bound, maxval=bound, dtype=jnp.float32)
        params[f"w{j + 1}"] = w
        params[f"b{j + 1}"] = b
    return params


def actor_forward_reference(obs, params, action_bound):
    # Pure-JAX reference matching the PyTorch module (exact-erf GELU).
    h = _gelu(obs @ params["w1"] + params["b1"], approximate=False)
    h = _gelu(h @ params["w2"] + params["b2"], approximate=False)
    h = h @ params["w3"] + params["b3"]
    return action_bound * jnp.tanh(h)


if __name__ == "__main__":
    # Module-consistent shapes (hidden_dims matches the PyTorch default),
    # small batch to keep the check fast.
    env_params = {"obs_dim": 16, "action_dim": 8, "action_bound": 2.0}
    hidden_dims = (256, 256)
    batch = 64

    key = jax.random.PRNGKey(0)
    k_obs, k_params = jax.random.split(key)
    obs = jax.random.normal(k_obs, (batch, env_params["obs_dim"]),
                            dtype=jnp.float32)
    params = init_actor_params(k_params, env_params["obs_dim"], hidden_dims,
                               env_params["action_dim"])

    ref = actor_forward_reference(obs, params, env_params["action_bound"])

    # 1) f32 weights + exact GELU, explicit 2-step grid (batch_tile=32):
    #    exercises pipelining and the closest-to-PyTorch numerics path.
    out_f32 = actor_forward(obs, params, env_params["action_bound"],
                            batch_tile=32, weight_dtype=jnp.float32,
                            approximate_gelu=False)
    out_f32 = jax.block_until_ready(out_f32)
    assert out_f32.shape == (batch, env_params["action_dim"])
    assert jnp.allclose(out_f32, ref, atol=2e-2, rtol=2e-2), "f32 path mismatch"

    # 2) Default fast path (bf16 MXU operands, tanh-approx GELU, auto tile).
    out_fast = actor_forward(obs, params, env_params["action_bound"])
    out_fast = jax.block_until_ready(out_fast)
    assert out_fast.shape == (batch, env_params["action_dim"])
    assert jnp.allclose(out_fast, ref, atol=5e-2, rtol=5e-2), "fast path mismatch"

    print("KERNEL_OK")
</pallas_src>

<mosaic_0001>
module attributes {stable_mosaic.version = 11 : i64} {
  func.func @_actor_kernel(%arg0: i32, %arg1: memref<32x16xf32, #tpu.memory_space<vmem>>, %arg2: memref<16x256xf32, #tpu.memory_space<vmem>>, %arg3: memref<1x256xf32, #tpu.memory_space<vmem>>, %arg4: memref<256x256xf32, #tpu.memory_space<vmem>>, %arg5: memref<1x256xf32, #tpu.memory_space<vmem>>, %arg6: memref<256x8xf32, #tpu.memory_space<vmem>>, %arg7: memref<1x8xf32, #tpu.memory_space<vmem>>, %arg8: memref<32x8xf32, #tpu.memory_space<vmem>>) attributes {dimension_semantics = [#tpu.dimension_semantics<parallel>], iteration_bounds = array<i64: 2>, scalar_prefetch = 0 : i64, scratch_operands = 0 : i64, tpu.core_type = #tpu.core_type<tc>, window_params = [{transform_indices = @transform_0, window_bounds = array<i64: 32, 16>}, {pipeline_mode = #tpu.pipeline_mode<synchronous>, transform_indices = @transform_1, window_bounds = array<i64: 16, 256>}, {pipeline_mode = #tpu.pipeline_mode<synchronous>, transform_indices = @transform_2, window_bounds = array<i64: 1, 256>}, {pipeline_mode = #tpu.pipeline_mode<synchronous>, transform_indices = @transform_3, window_bounds = array<i64: 256, 256>}, {pipeline_mode = #tpu.pipeline_mode<synchronous>, transform_indices = @transform_4, window_bounds = array<i64: 1, 256>}, {pipeline_mode = #tpu.pipeline_mode<synchronous>, transform_indices = @transform_5, window_bounds = array<i64: 256, 8>}, {pipeline_mode = #tpu.pipeline_mode<synchronous>, transform_indices = @transform_6, window_bounds = array<i64: 1, 8>}, {transform_indices = @transform_7, window_bounds = array<i64: 32, 8>}]} {
    %c0 = arith.constant 0 : index
    %c0_0 = arith.constant 0 : index
    %0 = vector.load %arg1[%c0, %c0_0] : memref<32x16xf32, #tpu.memory_space<vmem>>, vector<32x16xf32>
    %c0_1 = arith.constant 0 : index
    %c0_2 = arith.constant 0 : index
    %1 = vector.load %arg2[%c0_1, %c0_2] : memref<16x256xf32, #tpu.memory_space<vmem>>, vector<16x256xf32>
    %cst = arith.constant dense<0.000000e+00> : vector<32x256xf32>
    %2 = tpu.matmul %0, %1, %cst {dimension_numbers = #tpu.dot_dimension_numbers<[1], [0], [0], [1], [0, 0, 1, 1], [], []>} : vector<32x16xf32>, vector<16x256xf32>, vector<32x256xf32> -> vector<32x256xf32>
    %c0_3 = arith.constant 0 : index
    %c0_4 = arith.constant 0 : index
    %3 = vector.load %arg3[%c0_3, %c0_4] : memref<1x256xf32, #tpu.memory_space<vmem>>, vector<1x256xf32>
    %4 = vector.broadcast %3 : vector<1x256xf32> to vector<32x256xf32>
    %5 = arith.addf %2, %4 : vector<32x256xf32>
    %cst_5 = arith.constant 5.000000e-01 : f32
    %6 = vector.broadcast %cst_5 : f32 to vector<32x256xf32>
    %7 = arith.mulf %6, %5 : vector<32x256xf32>
    %cst_6 = arith.constant 0.707106769 : f32
    %8 = vector.broadcast %cst_6 : f32 to vector<32x256xf32>
    %9 = arith.mulf %5, %8 : vector<32x256xf32>
    %10 = math.erf %9 : vector<32x256xf32>
    %cst_7 = arith.constant 1.000000e+00 : f32
    %11 = vector.broadcast %cst_7 : f32 to vector<32x256xf32>
    %12 = arith.addf %11, %10 : vector<32x256xf32>
    %13 = arith.mulf %7, %12 : vector<32x256xf32>
    %c0_8 = arith.constant 0 : index
    %c0_9 = arith.constant 0 : index
    %14 = vector.load %arg4[%c0_8, %c0_9] : memref<256x256xf32, #tpu.memory_space<vmem>>, vector<256x256xf32>
    %cst_10 = arith.constant dense<0.000000e+00> : vector<32x256xf32>
    %15 = tpu.matmul %13, %14, %cst_10 {dimension_numbers = #tpu.dot_dimension_numbers<[1], [0], [0], [1], [0, 0, 1, 1], [], []>} : vector<32x256xf32>, vector<256x256xf32>, vector<32x256xf32> -> vector<32x256xf32>
    %c0_11 = arith.constant 0 : index
    %c0_12 = arith.constant 0 : index
    %16 = vector.load %arg5[%c0_11, %c0_12] : memref<1x256xf32, #tpu.memory_space<vmem>>, vector<1x256xf32>
    %17 = vector.broadcast %16 : vector<1x256xf32> to vector<32x256xf32>
    %18 = arith.addf %15, %17 : vector<32x256xf32>
    %cst_13 = arith.constant 5.000000e-01 : f32
    %19 = vector.broadcast %cst_13 : f32 to vector<32x256xf32>
    %20 = arith.mulf %19, %18 : vector<32x256xf32>
    %cst_14 = arith.constant 0.707106769 : f32
    %21 = vector.broadcast %cst_14 : f32 to vector<32x256xf32>
    %22 = arith.mulf %18, %21 : vector<32x256xf32>
    %23 = math.erf %22 : vector<32x256xf32>
    %cst_15 = arith.constant 1.000000e+00 : f32
    %24 = vector.broadcast %cst_15 : f32 to vector<32x256xf32>
    %25 = arith.addf %24, %23 : vector<32x256xf32>
    %26 = arith.mulf %20, %25 : vector<32x256xf32>
    %c0_16 = arith.constant 0 : index
    %c0_17 = arith.constant 0 : index
    %27 = vector.load %arg6[%c0_16, %c0_17] : memref<256x8xf32, #tpu.memory_space<vmem>>, vector<256x8xf32>
    %cst_18 = arith.constant dense<0.000000e+00> : vector<32x8xf32>
    %28 = tpu.matmul %26, %27, %cst_18 {dimension_numbers = #tpu.dot_dimension_numbers<[1], [0], [0], [1], [0, 0, 1, 1], [], []>} : vector<32x256xf32>, vector<256x8xf32>, vector<32x8xf32> -> vector<32x8xf32>
    %c0_19 = arith.constant 0 : index
    %c0_20 = arith.constant 0 : index
    %29 = vector.load %arg7[%c0_19, %c0_20] : memref<1x8xf32, #tpu.memory_space<vmem>>, vector<1x8xf32>
    %30 = vector.broadcast %29 : vector<1x8xf32> to vector<32x8xf32>
    %31 = arith.addf %28, %30 : vector<32x8xf32>
    %32 = math.tanh %31 : vector<32x8xf32>
    %cst_21 = arith.constant 2.000000e+00 : f32
    %33 = vector.broadcast %cst_21 : f32 to vector<32x8xf32>
    %34 = arith.mulf %33, %32 : vector<32x8xf32>
    %c0_22 = arith.constant 0 : index
    %c0_23 = arith.constant 0 : index
    %35 = vector.load %arg8[%c0_22, %c0_23] : memref<32x8xf32, #tpu.memory_space<vmem>>, vector<32x8xf32>
    tpu.vector_store %arg8[%c0_22, %c0_23], %34 {strides = array<i32>} : memref<32x8xf32, #tpu.memory_space<vmem>>, vector<32x8xf32>,
    return
  }
  func.func @transform_0(%arg0: i32) -> (i32, i32) {
    %c0_i32 = arith.constant 0 : i32
    %c0_i32_0 = arith.constant 0 : i32
    return %arg0, %c0_i32 : i32, i32
  }
  func.func @transform_1(%arg0: i32) -> (i32, i32) {
    %c0_i32 = arith.constant 0 : i32
    %c0_i32_0 = arith.constant 0 : i32
    %c0_i32_1 = arith.constant 0 : i32
    return %c0_i32, %c0_i32_0 : i32, i32
  }
  func.func @transform_2(%arg0: i32) -> (i32, i32) {
    %c0_i32 = arith.constant 0 : i32
    %c0_i32_0 = arith.constant 0 : i32
    %c0_i32_1 = arith.constant 0 : i32
    return %c0_i32, %c0_i32_0 : i32, i32
  }
  func.func @transform_3(%arg0: i32) -> (i32, i32) {
    %c0_i32 = arith.constant 0 : i32
    %c0_i32_0 = arith.constant 0 : i32
    %c0_i32_1 = arith.constant 0 : i32
    return %c0_i32, %c0_i32_0 : i32, i32
  }
  func.func @transform_4(%arg0: i32) -> (i32, i32) {
    %c0_i32 = arith.constant 0 : i32
    %c0_i32_0 = arith.constant 0 : i32
    %c0_i32_1 = arith.constant 0 : i32
    return %c0_i32, %c0_i32_0 : i32, i32
  }
  func.func @transform_5(%arg0: i32) -> (i32, i32) {
    %c0_i32 = arith.constant 0 : i32
    %c0_i32_0 = arith.constant 0 : i32
    %c0_i32_1 = arith.constant 0 : i32
    return %c0_i32, %c0_i32_0 : i32, i32
  }
  func.func @transform_6(%arg0: i32) -> (i32, i32) {
    %c0_i32 = arith.constant 0 : i32
    %c0_i32_0 = arith.constant 0 : i32
    %c0_i32_1 = arith.constant 0 : i32
    return %c0_i32, %c0_i32_0 : i32, i32
  }
  func.func @transform_7(%arg0: i32) -> (i32, i32) {
    %c0_i32 = arith.constant 0 : i32
    %c0_i32_0 = arith.constant 0 : i32
    return %arg0, %c0_i32 : i32, i32
  }
}

</mosaic_0001>

<llo_original>
// kernel: tpu_custom_call.1
$region0: #{tpu_custom_call.1}
  #allocation0 [shape = 'u32[]', space=smem, size = 0x4, offset = 0x4, fixed_abs, tag = 'smem constant byte address 0x4 - core index']
  #allocation1 [shape = 'u32[144,128]{1,0:T(1,128)}', space=vmem, size = 0x12000, scoped, tag = 'internal scratch']
  %s0 = inlined_call_operand.vmem [shape: f32[64,16], index: 0, kind: input, shape index: {}]
  %s1 = inlined_call_operand.vmem [shape: f32[16,256], index: 1, kind: input, shape index: {}]
  %s2 = inlined_call_operand.vmem [shape: f32[1,256], index: 2, kind: input, shape index: {}]
  %s3 = inlined_call_operand.hbm [shape: f32[256,256], index: 3, kind: input, shape index: {}]
  %s4 = inlined_call_operand.vmem [shape: f32[1,256], index: 4, kind: input, shape index: {}]
  %s5 = inlined_call_operand.vmem [shape: f32[256,8], index: 5, kind: input, shape index: {}]
  %s6 = inlined_call_operand.vmem [shape: f32[1,8], index: 6, kind: input, shape index: {}]
  %s7 = inlined_call_operand.vmem [shape: f32[64,8], index: 7, kind: output, shape index: {}]
  %s8 = sld [smem:[#allocation0]]
  $region65: #{tpu_custom_call.1} parent=0
    _
  %s10 = ssub.s32 1, %s8
  %s11 = scalar_select 0, %s10, %s8
  $region1: #{tpu_custom_call.1} parent=0
    #allocation2 [shape = 'u8[262144]{0}', space=vmem, size = 0x40000, scoped, tag = 'input window, operand 3, single buffered']
    #allocation3 [shape = 's32[2]{0}', space=sflag, size = 0x8, scoped, tag = 'scoped memory for tpu_custom_call.1']
    %12 = vsyncpa [#allocation3], 0
    loop: start=0, step=1, limit=4
    $region2: #{tpu_custom_call.1} parent=1 // loop_pre_header
      _
    $region3: #{tpu_custom_call.1} parent=1 // loop_header
      %s14 = sphi 0, %s18
      %p15 = scmp.ge.s32.totalorder %s14, 4
      %s24 = sphi 0, %s26
      %s27 = sphi 0, %s24
      %s28 = sphi 0, %s27
      %s44 = sphi 0, %s28
      %s48 = sphi 0, %s48
      %s50 = sphi 0, %s48
      %s51 = sphi 0, %s50
      %s65 = sphi 0, %s51
      %s69 = sphi 0, %s69
      %s71 = sphi 0, %s69
      %s72 = sphi 0, %s71
      %s86 = sphi 0, %s72
      %s90 = sphi 0, %s90
      %s92 = sphi 0, %s90
      %s93 = sphi 0, %s92
      %s107 = sphi 0, %s93
      %s111 = sphi 0, %s111
      %s113 = sphi 0, %s111
      %s114 = sphi 0, %s113
      %s128 = sphi 0, %s114
      %s132 = sphi 0, %s132
      %s134 = sphi 0, %s132
      %s135 = sphi 0, %s134
      %s149 = sphi 0, %s135
      %s153 = sphi 0, %s153
      %s155 = sphi 0, %s153
      %s156 = sphi 0, %s155
      %s170 = sphi 0, %s156
      %s176 = sphi 0, %s178
      %s179 = sphi 0, %s176
      %s180 = sphi 0, %s179
      %s196 = sphi 0, %s180
    $region4: #{tpu_custom_call.1} parent=1 // loop_header_branch
      %17 = sbr.rel (%p15) target = $region8
    $region5: #{tpu_custom_call.1} parent=1 // loop_body
      %s19 = ssub.s32 %s14, 1
      %s20 = ssub.s32 %s14, 2
      %s21 = sadd.s32 %s14, 1
      %s22 = ssub.s32 %s14, %s21
      %p23 = scmp.eq.s32.totalorder %s22, 0
      %s25 = sadd.s32 %s24, 1
      %s26 = scalar_select %p23, %s24, %s25
      %p29 = pneg %p23
      %p30 = scmp.eq.s32.totalorder %s14, 1
      %p31 = por %p29, %p30
      %p32 = scmp.ne.s32.totalorder %s24, %s27
      %p33 = scmp.eq.s32.totalorder %s14, 0
      %p34 = por %p32, %p33
      %p35 = scmp.ne.s32.totalorder %s24, %s27
      %p36 = scmp.eq.s32.totalorder %s19, 1
      %p37 = por %p35, %p36
      %p38 = scmp.ne.s32.totalorder %s27, %s28
      %p39 = scmp.eq.s32.totalorder %s19, 0
      %p40 = por %p38, %p39
      %p41 = scmp.ne.s32.totalorder %s27, %s28
      %p42 = scmp.eq.s32.totalorder %s20, 1
      %p43 = por %p41, %p42
      %p45 = scmp.ne.s32.totalorder %s28, %s44
      %p46 = scmp.eq.s32.totalorder %s20, 0
      %p47 = por %p45, %p46
      %s49 = sadd.s32 %s48, 1
      %p52 = scmp.eq.s32.totalorder %s14, 1
      %p53 = scmp.ne.s32.totalorder %s48, %s50
      %p54 = scmp.eq.s32.totalorder %s14, 0
      %p55 = por %p53, %p54
      %p56 = scmp.ne.s32.totalorder %s48, %s50
      %p57 = scmp.eq.s32.totalorder %s19, 1
      %p58 = por %p56, %p57
      %p59 = scmp.ne.s32.totalorder %s50, %s51
      %p60 = scmp.eq.s32.totalorder %s19, 0
      %p61 = por %p59, %p60
      %p62 = scmp.ne.s32.totalorder %s50, %s51
      %p63 = scmp.eq.s32.totalorder %s20, 1
      %p64 = por %p62, %p63
      %p66 = scmp.ne.s32.totalorder %s51, %s65
      %p67 = scmp.eq.s32.totalorder %s20, 0
      %p68 = por %p66, %p67
      %s70 = sadd.s32 %s69, 1
      %p73 = scmp.eq.s32.totalorder %s14, 1
      %p74 = scmp.ne.s32.totalorder %s69, %s71
      %p75 = scmp.eq.s32.totalorder %s14, 0
      %p76 = por %p74, %p75
      %p77 = scmp.ne.s32.totalorder %s69, %s71
      %p78 = scmp.eq.s32.totalorder %s19, 1
      %p79 = por %p77, %p78
      %p80 = scmp.ne.s32.totalorder %s71, %s72
      %p81 = scmp.eq.s32.totalorder %s19, 0
      %p82 = por %p80, %p81
      %p83 = scmp.ne.s32.totalorder %s71, %s72
      %p84 = scmp.eq.s32.totalorder %s20, 1
      %p85 = por %p83, %p84
      %p87 = scmp.ne.s32.totalorder %s72, %s86
      %p88 = scmp.eq.s32.totalorder %s20, 0
      %p89 = por %p87, %p88
      %s91 = sadd.s32 %s90, 1
      %p94 = scmp.eq.s32.totalorder %s14, 1
      %p95 = scmp.ne.s32.totalorder %s90, %s92
      %p96 = scmp.eq.s32.totalorder %s14, 0
      %p97 = por %p95, %p96
      %p98 = scmp.ne.s32.totalorder %s90, %s92
      %p99 = scmp.eq.s32.totalorder %s19, 1
      %p100 = por %p98, %p99
      %p101 = scmp.ne.s32.totalorder %s92, %s93
      %p102 = scmp.eq.s32.totalorder %s19, 0
      %p103 = por %p101, %p102
      %p104 = scmp.ne.s32.totalorder %s92, %s93
      %p105 = scmp.eq.s32.totalorder %s20, 1
      %p106 = por %p104, %p105
      %p108 = scmp.ne.s32.totalorder %s93, %s107
      %p109 = scmp.eq.s32.totalorder %s20, 0
      %p110 = por %p108, %p109
      %s112 = sadd.s32 %s111, 1
      %p115 = scmp.eq.s32.totalorder %s14, 1
      %p116 = scmp.ne.s32.totalorder %s111, %s113
      %p117 = scmp.eq.s32.totalorder %s14, 0
      %p118 = por %p116, %p117
      %p119 = scmp.ne.s32.totalorder %s111, %s113
      %p120 = scmp.eq.s32.totalorder %s19, 1
      %p121 = por %p119, %p120
      %p122 = scmp.ne.s32.totalorder %s113, %s114
      %p123 = scmp.eq.s32.totalorder %s19, 0
      %p124 = por %p122, %p123
      %p125 = scmp.ne.s32.totalorder %s113, %s114
      %p126 = scmp.eq.s32.totalorder %s20, 1
      %p127 = por %p125, %p126
      %p129 = scmp.ne.s32.totalorder %s114, %s128
      %p130 = scmp.eq.s32.totalorder %s20, 0
      %p131 = por %p129, %p130
      %s133 = sadd.s32 %s132, 1
      %p136 = scmp.eq.s32.totalorder %s14, 1
      %p137 = scmp.ne.s32.totalorder %s132, %s134
      %p138 = scmp.eq.s32.totalorder %s14, 0
      %p139 = por %p137, %p138
      %p140 = scmp.ne.s32.totalorder %s132, %s134
      %p141 = scmp.eq.s32.totalorder %s19, 1
      %p142 = por %p140, %p141
      %p143 = scmp.ne.s32.totalorder %s134, %s135
      %p144 = scmp.eq.s32.totalorder %s19, 0
      %p145 = por %p143, %p144
      %p146 = scmp.ne.s32.totalorder %s134, %s135
      %p147 = scmp.eq.s32.totalorder %s20, 1
      %p148 = por %p146, %p147
      %p150 = scmp.ne.s32.totalorder %s135, %s149
      %p151 = scmp.eq.s32.totalorder %s20, 0
      %p152 = por %p150, %p151
      %s154 = sadd.s32 %s153, 1
      %p157 = scmp.eq.s32.totalorder %s14, 1
      %p158 = scmp.ne.s32.totalorder %s153, %s155
      %p159 = scmp.eq.s32.totalorder %s14, 0
      %p160 = por %p158, %p159
      %p161 = scmp.ne.s32.totalorder %s153, %s155
      %p162 = scmp.eq.s32.totalorder %s19, 1
      %p163 = por %p161, %p162
      %p164 = scmp.ne.s32.totalorder %s155, %s156
      %p165 = scmp.eq.s32.totalorder %s19, 0
      %p166 = por %p164, %p165
      %p167 = scmp.ne.s32.totalorder %s155, %s156
      %p168 = scmp.eq.s32.totalorder %s20, 1
      %p169 = por %p167, %p168
      %p171 = scmp.ne.s32.totalorder %s156, %s170
      %p172 = scmp.eq.s32.totalorder %s20, 0
      %p173 = por %p171, %p172
      %s174 = ssub.s32 %s14, %s21
      %p175 = scmp.eq.s32.totalorder %s174, 0
      %s177 = sadd.s32 %s176, 1
      %s178 = scalar_select %p175, %s176, %s177
      %p181 = pneg %p175
      %p182 = scmp.eq.s32.totalorder %s14, 1
      %p183 = por %p181, %p182
      %p184 = scmp.ne.s32.totalorder %s176, %s179
      %p185 = scmp.eq.s32.totalorder %s14, 0
      %p186 = por %p184, %p185
      %p187 = scmp.ne.s32.totalorder %s176, %s179
      %p188 = scmp.eq.s32.totalorder %s19, 1
      %p189 = por %p187, %p188
      %p190 = scmp.ne.s32.totalorder %s179, %s180
      %p191 = scmp.eq.s32.totalorder %s19, 0
      %p192 = por %p190, %p191
      %p193 = scmp.ne.s32.totalorder %s179, %s180
      %p194 = scmp.eq.s32.totalorder %s20, 1
      %p195 = por %p193, %p194
      %p197 = scmp.ne.s32.totalorder %s180, %s196
      %p198 = scmp.eq.s32.totalorder %s20, 0
      %p199 = por %p197, %p198
      %p200 = scmp.le.s32.totalorder 1, %s14
      %p201 = scmp.lt.s32.totalorder %s14, 3
      %p202 = pnand %p200, %p201
      %p203 = pneg %p202
      // Predicated region
      $region9: #{tpu_custom_call.1} parent=5 // pred_check
        _
      $region10: #{tpu_custom_call.1} parent=5 // pred_check_branch
        %205 = sbr.rel (%p202) target = $region12
      $region11: #{tpu_custom_call.1} parent=5 // pred_region
        %s206 = ssub.s32 %s14, 1
        // Predicated region
        $region13: #{tpu_custom_call.1} parent=11 // pred_check
          %p207 = pneg %p61
        $region14: #{tpu_custom_call.1} parent=11 // pred_check_branch
          %209 = sbr.rel (%p207) target = $region16
        $region15: #{tpu_custom_call.1} parent=11 // pred_region
          _
        $region16: #{tpu_custom_call.1} parent=11 // pred_fallthru
          _
        // Predicated region
        $region17: #{tpu_custom_call.1} parent=11 // pred_check
          %p210 = pneg %p82
        $region18: #{tpu_custom_call.1} parent=11 // pred_check_branch
          %212 = sbr.rel (%p210) target = $region20
        $region19: #{tpu_custom_call.1} parent=11 // pred_region
          _
        $region20: #{tpu_custom_call.1} parent=11 // pred_fallthru
          _
        // Predicated region
        $region21: #{tpu_custom_call.1} parent=11 // pred_check
          %p213 = pneg %p103
        $region22: #{tpu_custom_call.1} parent=11 // pred_check_branch
          %215 = sbr.rel (%p213) target = $region24
        $region23: #{tpu_custom_call.1} parent=11 // pred_region
          %s217 = ssub.s32 8192, 8192
          %218 = vsyncadd [#allocation3], %s217
          %s219 = sshll.u32 [#allocation2], 4
          %s220 = int_to_ptr.vmem [resolvable:$true] %s219
          %225 = dma.hbm_to_vmem [thread:$0]  %s3, 8192, %s220, [#allocation3], 256, 256, 16
        $region24: #{tpu_custom_call.1} parent=11 // pred_fallthru
          _
        // Predicated region
        $region25: #{tpu_custom_call.1} parent=11 // pred_check
          %p226 = pneg %p124
        $region26: #{tpu_custom_call.1} parent=11 // pred_check_branch
          %228 = sbr.rel (%p226) target = $region28
        $region27: #{tpu_custom_call.1} parent=11 // pred_region
          _
        $region28: #{tpu_custom_call.1} parent=11 // pred_fallthru
          _
        // Predicated region
        $region29: #{tpu_custom_call.1} parent=11 // pred_check
          %p229 = pneg %p145
        $region30: #{tpu_custom_call.1} parent=11 // pred_check_branch
          %231 = sbr.rel (%p229) target = $region32
        $region31: #{tpu_custom_call.1} parent=11 // pred_region
          _
        $region32: #{tpu_custom_call.1} parent=11 // pred_fallthru
          _
        // Predicated region
        $region33: #{tpu_custom_call.1} parent=11 // pred_check
          %p232 = pneg %p166
        $region34: #{tpu_custom_call.1} parent=11 // pred_check_branch
          %234 = sbr.rel (%p232) target = $region36
        $region35: #{tpu_custom_call.1} parent=11 // pred_region
          _
        $region36: #{tpu_custom_call.1} parent=11 // pred_fallthru
          _
      $region12: #{tpu_custom_call.1} parent=5 // pred_fallthru
        _
      %p235 = scmp.lt.s32.totalorder %s14, 2
      // Predicated region
      $region37: #{tpu_custom_call.1} parent=5 // pred_check
        %p236 = pneg %p235
      $region38: #{tpu_custom_call.1} parent=5 // pred_check_branch
        %238 = sbr.rel (%p236) target = $region40
      $region39: #{tpu_custom_call.1} parent=5 // pred_region
        // Predicated region
        $region41: #{tpu_custom_call.1} parent=39 // pred_check
          %p239 = pneg %p34
        $region42: #{tpu_custom_call.1} parent=39 // pred_check_branch
          %241 = sbr.rel (%p239) target = $region44
        $region43: #{tpu_custom_call.1} parent=39 // pred_region
          %s242 = smul.u32 4, %s14
          %p243 = scmp.lt.s32.totalorder %s242, 7
          %s244 = scalar_select %p243, %s242, 7
          %s245 = smul.addr %s244, 8
          %s246 = scalar_lea.vmem %s0, %s245
          %s247 = smul.u32 4, %s14
        $region44: #{tpu_custom_call.1} parent=39 // pred_fallthru
          _
      $region40: #{tpu_custom_call.1} parent=5 // pred_fallthru
        _
      %p248 = scmp.le.s32.totalorder 1, %s14
      %p249 = scmp.lt.s32.totalorder %s14, 3
      %p250 = pnand %p248, %p249
      %p251 = pneg %p250
      // Predicated region
      $region45: #{tpu_custom_call.1} parent=5 // pred_check
        _
      $region46: #{tpu_custom_call.1} parent=5 // pred_check_branch
        %253 = sbr.rel (%p250) target = $region48
      $region47: #{tpu_custom_call.1} parent=5 // pred_region
        %s254 = ssub.s32 %s14, 1
        // Predicated region
        $region49: #{tpu_custom_call.1} parent=47 // pred_check
          %p255 = pneg %p103
        $region50: #{tpu_custom_call.1} parent=47 // pred_check_branch
          %257 = sbr.rel (%p255) target = $region52
        $region51: #{tpu_custom_call.1} parent=47 // pred_region
          %258 = dma.done [#allocation3], 8192
        $region52: #{tpu_custom_call.1} parent=47 // pred_fallthru
          _
        %s259 = smul.u32 4, %s19
        %p260 = scmp.lt.s32.totalorder %s259, 7
        %s261 = scalar_select %p260, %s259, 7
        %s262 = smul.addr %s261, 8
        %s263 = scalar_lea.vmem %s0, %s262
        %p264 = pneg %p40
        %p265 = pneg %p37
        %p266 = pneg %p61
        %p267 = pneg %p58
        %p268 = pneg %p82
        %p269 = pneg %p79
        %p270 = pneg %p103
        %p271 = pneg %p100
        %p272 = pneg %p124
        %p273 = pneg %p121
        %p274 = pneg %p145
        %p275 = pneg %p142
        %p276 = pneg %p166
        %p277 = pneg %p163
        %p278 = pneg %p192
        %p279 = pneg %p189
        %s280 = smul.u32 4, %s19
        %p281 = scmp.lt.s32.totalorder %s280, 7
        %s282 = scalar_select %p281, %s280, 7
        %s283 = smul.addr %s282, 8
        %s284 = scalar_lea.vmem %s7, %s283
        %s285 = smul.u32 4, %s19
        %p286 = scmp.lt.s32.totalorder %s285, 7
        %s287 = scalar_select %p286, %s285, 7
        %s288 = smul.addr %s287, 8
        %s289 = scalar_lea.vmem %s0, %s288
        %s290 = smul.u32 4, %s19
        %s291 = smul.u32 4, %s19
        %p292 = scmp.lt.s32.totalorder %s291, 7
        %s293 = scalar_select %p292, %s291, 7
        %s294 = smul.addr %s293, 8
        %s295 = scalar_lea.vmem %s7, %s294
        %s296 = smul.u32 4, %s19
        %v297 = vld [vmem:[%s289] sm:$0xff]
        %v298 = vld [vmem:[%s289 + $0x8] sm:$0xff]
        %v299 = vld [vmem:[%s289 + $0x10] sm:$0xff]
        %v300 = vld [vmem:[%s289 + $0x18] sm:$0xff]
        %v301 = vld [vmem:[%s1] sm:$0xff]
        %v302 = vld [vmem:[%s1 + $0x8] sm:$0xff]
        %v303 = vld [vmem:[%s1 + $0x10] sm:$0xff]
        %v304 = vld [vmem:[%s1 + $0x18] sm:$0xff]
        %v305 = vld [vmem:[%s2] sm:$0x3]
        %v307 = vlaneseq
        %v308 = vshrl.u32 %v307, 7
        %v309 = vsub.s32 0, %v308
        %v310 = vrot.slane %v305, %v309
        %v311 = vlaneseq
        %v312 = vshrl.u32 %v311, 7
        %v313 = vsub.s32 1, %v312
        %v314 = vrot.slane %v305, %v313
        %vm317 = vcmask 130048
        %v319 = vsel %vm317, %v297, 0
        %v322 = vsel %vm317, %v298, 0
        %v325 = vsel %vm317, %v299, 0
        %v328 = vsel %vm317, %v300, 0
        %330 = vmatprep.subr.mxu0 %v302
        %331 = vmatpush1.msra.mxu0 %v301
        %332 = vmatprep.subr.mxu0 %v304
        %333 = vmatpush1.msra.mxu0 %v303
        %334 = vmatprep.subr.mxu0 0.0
        %335 = vmatpush1.msra.mxu0 0.0
        %336 = vmatprep.subr.mxu0 0.0
        %337 = vmatpush1.msra.mxu0 0.0
        %338 = vmatprep.subr.mxu0 0.0
        %339 = vmatpush1.msra.mxu0 0.0
        %340 = vmatprep.subr.mxu0 0.0
        %341 = vmatpush1.msra.mxu0 0.0
        %342 = vmatprep.subr.mxu0 0.0
        %343 = vmatpush1.msra.mxu0 0.0
        %344 = vmatprep.subr.mxu0 0.0
        %345 = vmatpush1.msra.mxu0 0.0
        %346 = vmatprep.subr.mxu0 0.0
        %347 = vmatpush1.msra.mxu0 0.0
        %348 = vmatprep.subr.mxu0 0.0
        %349 = vmatpush1.msra.mxu0 0.0
        %350 = vmatprep.subr.mxu0 0.0
        %351 = vmatpush1.msra.mxu0 0.0
        %352 = vmatprep.subr.mxu0 0.0
        %353 = vmatpush1.msra.mxu0 0.0
        %354 = vmatprep.subr.mxu0 0.0
        %355 = vmatpush1.msra.mxu0 0.0
        %356 = vmatprep.subr.mxu0 0.0
        %357 = vmatpush1.msra.mxu0 0.0
        %358 = vmatprep.subr.mxu0 0.0
        %359 = vmatpush1.msra.mxu0 0.0
        %360 = vmatprep.subr.mxu0 0.0
        %361 = vmatpush1.msra.mxu0 0.0
        %362 = vmatprep.subr.mxu0 0.0
        %363 = vmatpush1.msra.mxu0 0.0
        %364 = vmatprep.subr.mxu0 0.0
        %365 = vmatpush1.msra.mxu0 0.0
        %366 = vmatprep.subr.mxu0 0.0
        %367 = vmatpush1.msra.mxu0 0.0
        %368 = vmatprep.subr.mxu0 0.0
        %369 = vmatpush1.msra.mxu0 0.0
        %370 = vmatprep.subr.mxu0 0.0
        %371 = vmatpush1.msra.mxu0 0.0
        %372 = vmatprep.subr.mxu0 0.0
        %373 = vmatpush1.msra.mxu0 0.0
        %374 = vmatprep.subr.mxu0 0.0
        %375 = vmatpush1.msra.mxu0 0.0
        %376 = vmatprep.subr.mxu0 0.0
        %377 = vmatpush1.msra.mxu0 0.0
        %378 = vmatprep.subr.mxu0 0.0
        %379 = vmatpush1.msra.mxu0 0.0
        %380 = vmatprep.subr.mxu0 0.0
        %381 = vmatpush1.msra.mxu0 0.0
        %382 = vmatprep.subr.mxu0 0.0
        %383 = vmatpush1.msra.mxu0 0.0
        %384 = vmatprep.subr.mxu0 0.0
        %385 = vmatpush1.msra.mxu0 0.0
        %386 = vmatprep.subr.mxu0 0.0
        %387 = vmatpush1.msra.mxu0 0.0
        %388 = vmatprep.subr.mxu0 0.0
        %389 = vmatpush1.msra.mxu0 0.0
        %390 = vmatprep.subr.mxu0 0.0
        %391 = vmatpush1.msra.mxu0 0.0
        %392 = vmatprep.subr.mxu0 0.0
        %393 = vmatpush1.msra.mxu0 0.0
        %394 = vmatprep.mubr.f32.mxu0 0.0
        %395 = vmatmul.mubr.f32.gmra.mrb[0].mxu0 %v319
        %v396 = vpop.f32.mrb[0].mxu0
        %v397 = vadd.f32 %v310, %v396
        %v398 = vpop.f32.mrb[0].mxu0
        %v399 = vadd.f32 %v314, %v398
        %400 = vmatprep.mubr.f32.mxu0 0.0
        %401 = vmatmul.mubr.f32.gmra.mrb[0].mxu0 %v322
        %v402 = vpop.f32.mrb[0].mxu0
        %v403 = vadd.f32 %v310, %v402
        %v404 = vpop.f32.mrb[0].mxu0
        %v405 = vadd.f32 %v314, %v404
        %406 = vmatprep.mubr.f32.mxu0 0.0
        %407 = vmatmul.mubr.f32.gmra.mrb[0].mxu0 %v325
        %v408 = vpop.f32.mrb[0].mxu0
        %v409 = vadd.f32 %v310, %v408
        %v410 = vpop.f32.mrb[0].mxu0
        %v411 = vadd.f32 %v314, %v410
        %412 = vmatprep.mubr.f32.mxu0 0.0
        %413 = vmatmul.mubr.f32.gmra.mrb[0].mxu0 %v328
        %v414 = vpop.f32.mrb[0].mxu0
        %v415 = vadd.f32 %v310, %v414
        %v416 = vpop.f32.mrb[0].mxu0
        %v417 = vadd.f32 %v314, %v416
        %418 = vdwg.mxu0
        %v419 = vmul.f32 %v397, 0.5
        %v420 = vmul.f32 %v399, 0.5
        %v421 = vmul.f32 %v403, 0.5
        %v422 = vmul.f32 %v405, 0.5
        %v423 = vmul.f32 %v409, 0.5
        %v424 = vmul.f32 %v411, 0.5
        %v425 = vmul.f32 %v415, 0.5
        %v426 = vmul.f32 %v417, 0.5
        %v427 = vmul.f32 %v397, 0.70710677
        %v428 = vmul.f32 %v399, 0.70710677
        %v429 = vmul.f32 %v403, 0.70710677
        %v430 = vmul.f32 %v405, 0.70710677
        %v431 = vmul.f32 %v409, 0.70710677
        %v432 = vmul.f32 %v411, 0.70710677
        %v433 = vmul.f32 %v415, 0.70710677
        %v434 = vmul.f32 %v417, 0.70710677
        %v435 = verf.f32.pop %v427
        %v436 = verf.f32.pop %v428
        %v437 = verf.f32.pop %v429
        %v438 = verf.f32.pop %v430
        %v439 = verf.f32.pop %v431
        %v440 = verf.f32.pop %v432
        %v441 = verf.f32.pop %v433
        %v442 = verf.f32.pop %v434
        %v443 = vadd.f32 %v435, 1.0
        %v444 = vadd.f32 %v436, 1.0
        %v445 = vadd.f32 %v437, 1.0
        %v446 = vadd.f32 %v438, 1.0
        %v447 = vadd.f32 %v439, 1.0
        %v448 = vadd.f32 %v440, 1.0
        %v449 = vadd.f32 %v441, 1.0
        %v450 = vadd.f32 %v442, 1.0
        %v451 = vmul.f32 %v419, %v443
        %v452 = vmul.f32 %v420, %v444
        %v453 = vmul.f32 %v421, %v445
        %v454 = vmul.f32 %v422, %v446
        %v455 = vmul.f32 %v423, %v447
        %v456 = vmul.f32 %v424, %v448
        %v457 = vmul.f32 %v425, %v449
        %v458 = vmul.f32 %v426, %v450
        %v459 = vld [vmem:[#allocation2] sm:$0xff]
        %v460 = vld [vmem:[#allocation2 + $0x8] sm:$0xff]
        %v461 = vld [vmem:[#allocation2 + $0x10] sm:$0xff]
        %v462 = vld [vmem:[#allocation2 + $0x18] sm:$0xff]
        %v463 = vld [vmem:[#allocation2 + $0x20] sm:$0xff]
        %v464 = vld [vmem:[#allocation2 + $0x28] sm:$0xff]
        %v465 = vld [vmem:[#allocation2 + $0x30] sm:$0xff]
        %v466 = vld [vmem:[#allocation2 + $0x38] sm:$0xff]
        %v467 = vld [vmem:[#allocation2 + $0x40] sm:$0xff]
        %v468 = vld [vmem:[#allocation2 + $0x48] sm:$0xff]
        %v469 = vld [vmem:[#allocation2 + $0x50] sm:$0xff]
        %v470 = vld [vmem:[#allocation2 + $0x58] sm:$0xff]
        %v471 = vld [vmem:[#allocation2 + $0x60] sm:$0xff]
        %v472 = vld [vmem:[#allocation2 + $0x68] sm:$0xff]
        %v473 = vld [vmem:[#allocation2 + $0x70] sm:$0xff]
        %v474 = vld [vmem:[#allocation2 + $0x78] sm:$0xff]
        %v475 = vld [vmem:[#allocation2 + $0x80] sm:$0xff]
        %v476 = vld [vmem:[#allocation2 + $0x88] sm:$0xff]
        %v477 = vld [vmem:[#allocation2 + $0x90] sm:$0xff]
        %v478 = vld [vmem:[#allocation2 + $0x98] sm:$0xff]
        %v479 = vld [vmem:[#allocation2 + $0xa0] sm:$0xff]
        %v480 = vld [vmem:[#allocation2 + $0xa8] sm:$0xff]
        %v481 = vld [vmem:[#allocation2 + $0xb0] sm:$0xff]
        %v482 = vld [vmem:[#allocation2 + $0xb8] sm:$0xff]
        %v483 = vld [vmem:[#allocation2 + $0xc0] sm:$0xff]
        %v484 = vld [vmem:[#allocation2 + $0xc8] sm:$0xff]
        %v485 = vld [vmem:[#allocation2 + $0xd0] sm:$0xff]
        %v486 = vld [vmem:[#allocation2 + $0xd8] sm:$0xff]
        %v487 = vld [vmem:[#allocation2 + $0xe0] sm:$0xff]
        %v488 = vld [vmem:[#allocation2 + $0xe8] sm:$0xff]
        %v489 = vld [vmem:[#allocation2 + $0xf0] sm:$0xff]
        %v490 = vld [vmem:[#allocation2 + $0xf8] sm:$0xff]
        %v491 = vld [vmem:[#allocation2 + $0x100] sm:$0xff]
        %v492 = vld [vmem:[#allocation2 + $0x108] sm:$0xff]
        %v493 = vld [vmem:[#allocation2 + $0x110] sm:$0xff]
        %v494 = vld [vmem:[#allocation2 + $0x118] sm:$0xff]
        %v495 = vld [vmem:[#allocation2 + $0x120] sm:$0xff]
        %v496 = vld [vmem:[#allocation2 + $0x128] sm:$0xff]
        %v497 = vld [vmem:[#allocation2 + $0x130] sm:$0xff]
        %v498 = vld [vmem:[#allocation2 + $0x138] sm:$0xff]
        %v499 = vld [vmem:[#allocation2 + $0x140] sm:$0xff]
        %v500 = vld [vmem:[#allocation2 + $0x148] sm:$0xff]
        %v501 = vld [vmem:[#allocation2 + $0x150] sm:$0xff]
        %v502 = vld [vmem:[#allocation2 + $0x158] sm:$0xff]
        %v503 = vld [vmem:[#allocation2 + $0x160] sm:$0xff]
        %v504 = vld [vmem:[#allocation2 + $0x168] sm:$0xff]
        %v505 = vld [vmem:[#allocation2 + $0x170] sm:$0xff]
        %v506 = vld [vmem:[#allocation2 + $0x178] sm:$0xff]
        %v507 = vld [vmem:[#allocation2 + $0x180] sm:$0xff]
        %v508 = vld [vmem:[#allocation2 + $0x188] sm:$0xff]
        %v509 = vld [vmem:[#allocation2 + $0x190] sm:$0xff]
        %v510 = vld [vmem:[#allocation2 + $0x198] sm:$0xff]
        %v511 = vld [vmem:[#allocation2 + $0x1a0] sm:$0xff]
        %v512 = vld [vmem:[#allocation2 + $0x1a8] sm:$0xff]
        %v513 = vld [vmem:[#allocation2 + $0x1b0] sm:$0xff]
        %v514 = vld [vmem:[#allocation2 + $0x1b8] sm:$0xff]
        %v515 = vld [vmem:[#allocation2 + $0x1c0] sm:$0xff]
        %v516 = vld [vmem:[#allocation2 + $0x1c8] sm:$0xff]
        %v517 = vld [vmem:[#allocation2 + $0x1d0] sm:$0xff]
        %v518 = vld [vmem:[#allocation2 + $0x1d8] sm:$0xff]
        %v519 = vld [vmem:[#allocation2 + $0x1e0] sm:$0xff]
        %v520 = vld [vmem:[#allocation2 + $0x1e8] sm:$0xff]
        %v521 = vld [vmem:[#allocation2 + $0x1f0] sm:$0xff]
        %v522 = vld [vmem:[#allocation2 + $0x1f8] sm:$0xff]
        %v523 = vld [vmem:[%s4] sm:$0x3]
        %v525 = vlaneseq
        %v526 = vshrl.u32 %v525, 7
        %v527 = vsub.s32 0, %v526
        %v528 = vrot.slane %v523, %v527
        %v529 = vlaneseq
        %v530 = vshrl.u32 %v529, 7
        %v531 = vsub.s32 1, %v530
        %v532 = vrot.slane %v523, %v531
        %535 = vmatprep.subr.mxu0 %v460
        %536 = vmatpush1.msra.mxu0 %v459
        %537 = vmatprep.subr.mxu0 %v462
        %538 = vmatpush1.msra.mxu0 %v461
        %539 = vmatprep.subr.mxu0 %v464
        %540 = vmatpush1.msra.mxu0 %v463
        %541 = vmatprep.subr.mxu0 %v466
        %542 = vmatpush1.msra.mxu0 %v465
        %543 = vmatprep.subr.mxu0 %v468
        %544 = vmatpush1.msra.mxu0 %v467
        %545 = vmatprep.subr.mxu0 %v470
        %546 = vmatpush1.msra.mxu0 %v469
        %547 = vmatprep.subr.mxu0 %v472
        %548 = vmatpush1.msra.mxu0 %v471
        %549 = vmatprep.subr.mxu0 %v474
        %550 = vmatpush1.msra.mxu0 %v473
        %551 = vmatprep.subr.mxu0 %v476
        %552 = vmatpush1.msra.mxu0 %v475
        %553 = vmatprep.subr.mxu0 %v478
        %554 = vmatpush1.msra.mxu0 %v477
        %555 = vmatprep.subr.mxu0 %v480
        %556 = vmatpush1.msra.mxu0 %v479
        %557 = vmatprep.subr.mxu0 %v482
        %558 = vmatpush1.msra.mxu0 %v481
        %559 = vmatprep.subr.mxu0 %v484
        %560 = vmatpush1.msra.mxu0 %v483
        %561 = vmatprep.subr.mxu0 %v486
        %562 = vmatpush1.msra.mxu0 %v485
        %563 = vmatprep.subr.mxu0 %v488
        %564 = vmatpush1.msra.mxu0 %v487
        %565 = vmatprep.subr.mxu0 %v490
        %566 = vmatpush1.msra.mxu0 %v489
        %567 = vmatprep.subr.mxu0 %v492
        %568 = vmatpush1.msra.mxu0 %v491
        %569 = vmatprep.subr.mxu0 %v494
        %570 = vmatpush1.msra.mxu0 %v493
        %571 = vmatprep.subr.mxu0 %v496
        %572 = vmatpush1.msra.mxu0 %v495
        %573 = vmatprep.subr.mxu0 %v498
        %574 = vmatpush1.msra.mxu0 %v497
        %575 = vmatprep.subr.mxu0 %v500
        %576 = vmatpush1.msra.mxu0 %v499
        %577 = vmatprep.subr.mxu0 %v502
        %578 = vmatpush1.msra.mxu0 %v501
        %579 = vmatprep.subr.mxu0 %v504
        %580 = vmatpush1.msra.mxu0 %v503
        %581 = vmatprep.subr.mxu0 %v506
        %582 = vmatpush1.msra.mxu0 %v505
        %583 = vmatprep.subr.mxu0 %v508
        %584 = vmatpush1.msra.mxu0 %v507
        %585 = vmatprep.subr.mxu0 %v510
        %586 = vmatpush1.msra.mxu0 %v509
        %587 = vmatprep.subr.mxu0 %v512
        %588 = vmatpush1.msra.mxu0 %v511
        %589 = vmatprep.subr.mxu0 %v514
        %590 = vmatpush1.msra.mxu0 %v513
        %591 = vmatprep.subr.mxu0 %v516
        %592 = vmatpush1.msra.mxu0 %v515
        %593 = vmatprep.subr.mxu0 %v518
        %594 = vmatpush1.msra.mxu0 %v517
        %595 = vmatprep.subr.mxu0 %v520
        %596 = vmatpush1.msra.mxu0 %v519
        %597 = vmatprep.subr.mxu0 %v522
        %598 = vmatpush1.msra.mxu0 %v521
        %599 = vmatprep.mubr.f32.mxu0 %v452
        %600 = vmatmul.mubr.f32.gmra.mrb[0].mxu0 %v451
        %v601 = vpop.f32.mrb[0].mxu0
        %v602 = vadd.f32 %v528, %v601
        %v603 = vpop.f32.mrb[0].mxu0
        %v604 = vadd.f32 %v532, %v603
        %605 = vmatprep.mubr.f32.mxu0 %v454
        %606 = vmatmul.mubr.f32.gmra.mrb[0].mxu0 %v453
        %v607 = vpop.f32.mrb[0].mxu0
        %v608 = vadd.f32 %v528, %v607
        %v609 = vpop.f32.mrb[0].mxu0
        %v610 = vadd.f32 %v532, %v609
        %611 = vmatprep.mubr.f32.mxu0 %v456
        %612 = vmatmul.mubr.f32.gmra.mrb[0].mxu0 %v455
        %v613 = vpop.f32.mrb[0].mxu0
        %v614 = vadd.f32 %v528, %v613
        %v615 = vpop.f32.mrb[0].mxu0
        %v616 = vadd.f32 %v532, %v615
        %617 = vmatprep.mubr.f32.mxu0 %v458
        %618 = vmatmul.mubr.f32.gmra.mrb[0].mxu0 %v457
        %v619 = vpop.f32.mrb[0].mxu0
        %v620 = vadd.f32 %v528, %v619
        %v621 = vpop.f32.mrb[0].mxu0
        %v622 = vadd.f32 %v532, %v621
        %623 = vdwg.mxu0
        %v624 = vmul.f32 %v602, 0.5
        %v625 = vmul.f32 %v604, 0.5
        %v626 = vmul.f32 %v608, 0.5
        %v627 = vmul.f32 %v610, 0.5
        %v628 = vmul.f32 %v614, 0.5
        %v629 = vmul.f32 %v616, 0.5
        %v630 = vmul.f32 %v620, 0.5
        %v631 = vmul.f32 %v622, 0.5
        %v632 = vmul.f32 %v602, 0.70710677
        %v633 = vmul.f32 %v604, 0.70710677
        %v634 = vmul.f32 %v608, 0.70710677
        %v635 = vmul.f32 %v610, 0.70710677
        %v636 = vmul.f32 %v614, 0.70710677
        %v637 = vmul.f32 %v616, 0.70710677
        %v638 = vmul.f32 %v620, 0.70710677
        %v639 = vmul.f32 %v622, 0.70710677
        %v640 = verf.f32.pop %v632
        %v641 = verf.f32.pop %v633
        %v642 = verf.f32.pop %v634
        %v643 = verf.f32.pop %v635
        %v644 = verf.f32.pop %v636
        %v645 = verf.f32.pop %v637
        %v646 = verf.f32.pop %v638
        %v647 = verf.f32.pop %v639
        %v648 = vadd.f32 %v640, 1.0
        %v649 = vadd.f32 %v641, 1.0
        %v650 = vadd.f32 %v642, 1.0
        %v651 = vadd.f32 %v643, 1.0
        %v652 = vadd.f32 %v644, 1.0
        %v653 = vadd.f32 %v645, 1.0
        %v654 = vadd.f32 %v646, 1.0
        %v655 = vadd.f32 %v647, 1.0
        %v656 = vmul.f32 %v624, %v648
        %v657 = vmul.f32 %v625, %v649
        %v658 = vmul.f32 %v626, %v650
        %v659 = vmul.f32 %v627, %v651
        %v660 = vmul.f32 %v628, %v652
        %v661 = vmul.f32 %v629, %v653
        %v662 = vmul.f32 %v630, %v654
        %v663 = vmul.f32 %v631, %v655
        %v664 = vld [vmem:[%s5] sm:$0xff]
        %v665 = vld [vmem:[%s5 + $0x8] sm:$0xff]
        %v666 = vld [vmem:[%s5 + $0x10] sm:$0xff]
        %v667 = vld [vmem:[%s5 + $0x18] sm:$0xff]
        %v668 = vld [vmem:[%s5 + $0x20] sm:$0xff]
        %v669 = vld [vmem:[%s5 + $0x28] sm:$0xff]
        %v670 = vld [vmem:[%s5 + $0x30] sm:$0xff]
        %v671 = vld [vmem:[%s5 + $0x38] sm:$0xff]
        %v672 = vld [vmem:[%s5 + $0x40] sm:$0xff]
        %v673 = vld [vmem:[%s5 + $0x48] sm:$0xff]
        %v674 = vld [vmem:[%s5 + $0x50] sm:$0xff]
        %v675 = vld [vmem:[%s5 + $0x58] sm:$0xff]
        %v676 = vld [vmem:[%s5 + $0x60] sm:$0xff]
        %v677 = vld [vmem:[%s5 + $0x68] sm:$0xff]
        %v678 = vld [vmem:[%s5 + $0x70] sm:$0xff]
        %v679 = vld [vmem:[%s5 + $0x78] sm:$0xff]
        %v680 = vld [vmem:[%s5 + $0x80] sm:$0xff]
        %v681 = vld [vmem:[%s5 + $0x88] sm:$0xff]
        %v682 = vld [vmem:[%s5 + $0x90] sm:$0xff]
        %v683 = vld [vmem:[%s5 + $0x98] sm:$0xff]
        %v684 = vld [vmem:[%s5 + $0xa0] sm:$0xff]
        %v685 = vld [vmem:[%s5 + $0xa8] sm:$0xff]
        %v686 = vld [vmem:[%s5 + $0xb0] sm:$0xff]
        %v687 = vld [vmem:[%s5 + $0xb8] sm:$0xff]
        %v688 = vld [vmem:[%s5 + $0xc0] sm:$0xff]
        %v689 = vld [vmem:[%s5 + $0xc8] sm:$0xff]
        %v690 = vld [vmem:[%s5 + $0xd0] sm:$0xff]
        %v691 = vld [vmem:[%s5 + $0xd8] sm:$0xff]
        %v692 = vld [vmem:[%s5 + $0xe0] sm:$0xff]
        %v693 = vld [vmem:[%s5 + $0xe8] sm:$0xff]
        %v694 = vld [vmem:[%s5 + $0xf0] sm:$0xff]
        %v695 = vld [vmem:[%s5 + $0xf8] sm:$0xff]
        %v696 = vld [vmem:[%s6] sm:$0x1]
        %v698 = vlaneseq
        %v699 = vshrl.u32 %v698, 7
        %v700 = vsub.s32 0, %v699
        %v701 = vrot.slane %v696, %v700
        %703 = vmatprep.subr.mxu0 0.0
        %704 = vmatpush1.msra.mxu0 %v664
        %705 = vmatprep.subr.mxu0 0.0
        %706 = vmatpush1.msra.mxu0 %v665
        %707 = vmatprep.subr.mxu0 0.0
        %708 = vmatpush1.msra.mxu0 %v666
        %709 = vmatprep.subr.mxu0 0.0
        %710 = vmatpush1.msra.mxu0 %v667
        %711 = vmatprep.subr.mxu0 0.0
        %712 = vmatpush1.msra.mxu0 %v668
        %713 = vmatprep.subr.mxu0 0.0
        %714 = vmatpush1.msra.mxu0 %v669
        %715 = vmatprep.subr.mxu0 0.0
        %716 = vmatpush1.msra.mxu0 %v670
        %717 = vmatprep.subr.mxu0 0.0
        %718 = vmatpush1.msra.mxu0 %v671
        %719 = vmatprep.subr.mxu0 0.0
        %720 = vmatpush1.msra.mxu0 %v672
        %721 = vmatprep.subr.mxu0 0.0
        %722 = vmatpush1.msra.mxu0 %v673
        %723 = vmatprep.subr.mxu0 0.0
        %724 = vmatpush1.msra.mxu0 %v674
        %725 = vmatprep.subr.mxu0 0.0
        %726 = vmatpush1.msra.mxu0 %v675
        %727 = vmatprep.subr.mxu0 0.0
        %728 = vmatpush1.msra.mxu0 %v676
        %729 = vmatprep.subr.mxu0 0.0
        %730 = vmatpush1.msra.mxu0 %v677
        %731 = vmatprep.subr.mxu0 0.0
        %732 = vmatpush1.msra.mxu0 %v678
        %733 = vmatprep.subr.mxu0 0.0
        %734 = vmatpush1.msra.mxu0 %v679
        %735 = vmatprep.subr.mxu0 0.0
        %736 = vmatpush1.msra.mxu0 %v680
        %737 = vmatprep.subr.mxu0 0.0
        %738 = vmatpush1.msra.mxu0 %v681
        %739 = vmatprep.subr.mxu0 0.0
        %740 = vmatpush1.msra.mxu0 %v682
        %741 = vmatprep.subr.mxu0 0.0
        %742 = vmatpush1.msra.mxu0 %v683
        %743 = vmatprep.subr.mxu0 0.0
        %744 = vmatpush1.msra.mxu0 %v684
        %745 = vmatprep.subr.mxu0 0.0
        %746 = vmatpush1.msra.mxu0 %v685
        %747 = vmatprep.subr.mxu0 0.0
        %748 = vmatpush1.msra.mxu0 %v686
        %749 = vmatprep.subr.mxu0 0.0
        %750 = vmatpush1.msra.mxu0 %v687
        %751 = vmatprep.subr.mxu0 0.0
        %752 = vmatpush1.msra.mxu0 %v688
        %753 = vmatprep.subr.mxu0 0.0
        %754 = vmatpush1.msra.mxu0 %v689
        %755 = vmatprep.subr.mxu0 0.0
        %756 = vmatpush1.msra.mxu0 %v690
        %757 = vmatprep.subr.mxu0 0.0
        %758 = vmatpush1.msra.mxu0 %v691
        %759 = vmatprep.subr.mxu0 0.0
        %760 = vmatpush1.msra.mxu0 %v692
        %761 = vmatprep.subr.mxu0 0.0
        %762 = vmatpush1.msra.mxu0 %v693
        %763 = vmatprep.subr.mxu0 0.0
        %764 = vmatpush1.msra.mxu0 %v694
        %765 = vmatprep.subr.mxu0 0.0
        %766 = vmatpush1.msra.mxu0 %v695
        %767 = vmatprep.mubr.f32.mxu0 %v657
        %768 = vmatmul.mubr.f32.gmra.mrb[0].mxu0 %v656
        %v769 = vpop.f32.mrb[0].mxu0
        %v770 = vadd.f32 %v701, %v769
        %v771 = vpop.f32.mrb[0].mxu0
        %772 = vmatprep.mubr.f32.mxu0 %v659
        %773 = vmatmul.mubr.f32.gmra.mrb[0].mxu0 %v658
        %v774 = vpop.f32.mrb[0].mxu0
        %v775 = vadd.f32 %v701, %v774
        %v776 = vpop.f32.mrb[0].mxu0
        %777 = vmatprep.mubr.f32.mxu0 %v661
        %778 = vmatmul.mubr.f32.gmra.mrb[0].mxu0 %v660
        %v779 = vpop.f32.mrb[0].mxu0
        %v780 = vadd.f32 %v701, %v779
        %v781 = vpop.f32.mrb[0].mxu0
        %782 = vmatprep.mubr.f32.mxu0 %v663
        %783 = vmatmul.mubr.f32.gmra.mrb[0].mxu0 %v662
        %v784 = vpop.f32.mrb[0].mxu0
        %v785 = vadd.f32 %v701, %v784
        %v786 = vpop.f32.mrb[0].mxu0
        %787 = vdwg.mxu0
        %v788 = vtanh.pop %v770
        %v789 = vtanh.pop %v775
        %v790 = vtanh.pop %v780
        %v791 = vtanh.pop %v785
        %v792 = vmul.f32 %v788, 2.0
        %v793 = vmul.f32 %v789, 2.0
        %v794 = vmul.f32 %v790, 2.0
        %v795 = vmul.f32 %v791, 2.0
        %vm796 = vcmask 64512
        %797 = vst.msk [vmem:[%s295] sm:$0xff] %vm796, %v792
        %798 = vst.msk [vmem:[%s295 + $0x8] sm:$0xff] %vm796, %v793
        %799 = vst.msk [vmem:[%s295 + $0x10] sm:$0xff] %vm796, %v794
        %800 = vst.msk [vmem:[%s295 + $0x18] sm:$0xff] %vm796, %v795
        %s801 = smul.u32 4, %s19
        %p802 = scmp.lt.s32.totalorder %s801, 7
        %s803 = scalar_select %p802, %s801, 7
        %s804 = smul.addr %s803, 8
        %s805 = scalar_lea.vmem %s7, %s804
        // Predicated region
        $region53: #{tpu_custom_call.1} parent=47 // pred_check
          %p806 = pneg %p189
        $region54: #{tpu_custom_call.1} parent=47 // pred_check_branch
          %808 = sbr.rel (%p806) target = $region56
        $region55: #{tpu_custom_call.1} parent=47 // pred_region
          %s809 = smul.u32 4, %s19
        $region56: #{tpu_custom_call.1} parent=47 // pred_fallthru
          _
      $region48: #{tpu_custom_call.1} parent=5 // pred_fallthru
        _
      %p810 = scmp.le.s32.totalorder 2, %s14
      // Predicated region
      $region57: #{tpu_custom_call.1} parent=5 // pred_check
        %p811 = pneg %p810
      $region58: #{tpu_custom_call.1} parent=5 // pred_check_branch
        %813 = sbr.rel (%p811) target = $region60
      $region59: #{tpu_custom_call.1} parent=5 // pred_region
        %s814 = ssub.s32 %s14, 2
        // Predicated region
        $region61: #{tpu_custom_call.1} parent=59 // pred_check
          %p815 = pneg %p195
        $region62: #{tpu_custom_call.1} parent=59 // pred_check_branch
          %817 = sbr.rel (%p815) target = $region64
        $region63: #{tpu_custom_call.1} parent=59 // pred_region
          %s818 = smul.u32 4, %s20
          %p819 = scmp.lt.s32.totalorder %s818, 7
          %s820 = scalar_select %p819, %s818, 7
          %s821 = smul.addr %s820, 8
          %s822 = scalar_lea.vmem %s7, %s821
        $region64: #{tpu_custom_call.1} parent=59 // pred_fallthru
          _
      $region60: #{tpu_custom_call.1} parent=5 // pred_fallthru
        _
    $region6: #{tpu_custom_call.1} parent=1 // loop_footer
      %s18 = sadd.s32 1, %s14
    $region7: #{tpu_custom_call.1} parent=1 // loop_footer_branch
      %13 = sbr.rel target = $region3
    $region8: #{tpu_custom_call.1} parent=1 // loop_exit
      _
    %823 = vsyncpa [#allocation3], 1
    %s824 = scalar_lea.sflag [#allocation3], 1
    %825 = vsyncpa %s824, 1

</llo_original>
